<compile_context>
chip_gen: v5e
topology: v5e:2x2
jax: 0.10.0
libtpu: 0.0.40
codegen_flags: <defaults>
</compile_context>

<pallas_src>
import math
from functools import partial

import jax
import jax.numpy as jnp
from jax import lax
from jax.experimental import pallas as pl
from jax.experimental.pallas import tpu as pltpu


_LANES = 512  # lane-dense last dim for the flattened fallback path


def _round_up(v, m):
    return ((v + m - 1) // m) * m


def _target_block_bytes():
    """~4 MiB blocks on v6e/v7x, conservative 2 MiB elsewhere (v5e/v4/unknown)."""
    try:
        kind = jax.devices()[0].device_kind.lower()
    except Exception:
        kind = ""
    if "v6" in kind or "v7" in kind:
        return 4 << 20
    return 2 << 20


def _choose_tiling(n_rows, row_bytes, row_align, target_block_bytes):
    """Grid first, then block_rows -> no pathological near-2x padding."""
    max_rows = max(row_align,
                   (target_block_bytes // max(row_bytes, 1)) // row_align * row_align)
    grid = pl.cdiv(n_rows, max_rows)
    if grid == 1 and n_rows >= 2 * row_align:
        grid = 2  # v7x: give both TensorCores work (harmless on 1-TC chips)
    block_rows = _round_up(pl.cdiv(n_rows, grid), row_align)
    return grid, block_rows


def _noise_kernel(seed_ref, x_ref, o_ref, *, amplitude, lanes, half):
    """o = x + amplitude * N(0,1); one counter hash produces TWO normals."""
    # --- counters (uint32; unique for tensors with < 2^32 elements) ---------
    row_ids = lax.broadcasted_iota(jnp.int32, (half, lanes), 0).astype(jnp.uint32)
    col_ids = lax.broadcasted_iota(jnp.int32, (half, lanes), 1).astype(jnp.uint32)
    base = pl.program_id(0).astype(jnp.uint32) * jnp.uint32(half * lanes)
    ctr = base + row_ids * jnp.uint32(lanes) + col_ids

    # Seed affine mix hoisted to a scalar (one per-element xor remains).
    seed_mix = (seed_ref[0].astype(jnp.uint32) * jnp.uint32(0x85EBCA77)
                + jnp.uint32(0x68E31DA4))

    # --- stream 1: one lowbias32 finalizer over the seeded counter ----------
    v = (ctr * jnp.uint32(0x9E3779B1)) ^ seed_mix
    v = v ^ (v >> 16)
    v = v * jnp.uint32(0x7FEB352D)
    v = v ^ (v >> 15)
    v = v * jnp.uint32(0x846CA68B)
    k1 = v ^ (v >> 16)
    # --- stream 2: cheap 3-op remix of k1 (decorrelated enough for noise) ---
    k2 = (k1 ^ (k1 >> 17)) * jnp.uint32(0xC2B2AE3D)

    # --- uniforms via the mantissa-bitcast trick (no int->float converts) ---
    one_bits = jnp.uint32(0x3F800000)
    u1 = jnp.float32(2.0) - pltpu.bitcast((k1 >> 9) | one_bits, jnp.float32)  # (0,1]
    u2 = pltpu.bitcast((k2 >> 9) | one_bits, jnp.float32) - jnp.float32(1.0)  # [0,1)

    # --- Box-Muller pair; amplitude folded into r ---------------------------
    r = jnp.float32(amplitude) * jnp.sqrt(jnp.float32(-2.0) * jnp.log(u1))
    theta = jnp.float32(2.0 * math.pi) * u2
    z_top = r * jnp.cos(theta)
    z_bot = r * jnp.sin(theta)

    o_ref[:half, :] = (x_ref[:half, :].astype(jnp.float32) + z_top).astype(o_ref.dtype)
    o_ref[half:, :] = (x_ref[half:, :].astype(jnp.float32) + z_bot).astype(o_ref.dtype)


def _run_noise_2d(x2d, amplitude, seed, lanes, grid, block_rows):
    """pallas_call over a (rows, lanes) view with (block_rows, lanes) tiles."""
    half = block_rows // 2
    seed_arr = jnp.asarray([seed], dtype=jnp.int32)
    kernel = partial(_noise_kernel, amplitude=float(amplitude), lanes=lanes, half=half)
    return pl.pallas_call(
        kernel,
        out_shape=jax.ShapeDtypeStruct(x2d.shape, x2d.dtype),
        grid_spec=pltpu.PrefetchScalarGridSpec(
            num_scalar_prefetch=1,
            grid=(grid,),
            in_specs=[pl.BlockSpec((block_rows, lanes), lambda i, sref: (i, 0))],
            out_specs=pl.BlockSpec((block_rows, lanes), lambda i, sref: (i, 0)),
        ),
        compiler_params=pltpu.CompilerParams(
            # Counter-based RNG -> no cross-iteration state -> megacore parallel.
            dimension_semantics=("parallel",),
        ),
    )(seed_arr, x2d)


def node_feature_noise(x, amplitude=0.1, seed=0):
    """Pallas equivalent of NodeFeatureNoise.forward on data.x.

    (`clone` in the original module is a no-op here: JAX arrays are immutable;
    the original's seed=None corresponds to passing a fresh integer seed.)
    """
    orig_shape = x.shape
    orig_dtype = x.dtype
    total = x.size
    if total == 0:
        return x

    itemsize = jnp.dtype(orig_dtype).itemsize
    # Sublane packing: f32 -> 16-row blocks, bf16 -> 32, int8/fp8 -> 64, so the
    # half-block store slices stay tile-aligned.
    row_align = 16 * max(1, 4 // itemsize)
    target = _target_block_bytes()

    # --- fast path: tile the (N, F) array directly (no ravel/pad/slice) -----
    if x.ndim >= 2 and orig_shape[-1] % 128 == 0 and (total // orig_shape[-1]) >= row_align:
        feat = orig_shape[-1]
        n_rows = total // feat
        x2d = x.reshape(n_rows, feat)
        grid, block_rows = _choose_tiling(n_rows, feat * itemsize, row_align, target)
        y2d = _run_noise_2d(x2d, amplitude, seed, feat, grid, block_rows)
        return y2d.reshape(orig_shape)

    # --- fallback: lane-dense flat view with explicit padding ---------------
    lanes = _LANES
    rows_needed = pl.cdiv(total, lanes)
    grid, block_rows = _choose_tiling(rows_needed, lanes * itemsize, row_align, target)
    padded_rows = grid * block_rows
    flat = jnp.ravel(x)
    pad = padded_rows * lanes - total
    if pad:
        flat = jnp.pad(flat, (0, pad))
    x2d = flat.reshape(padded_rows, lanes)
    y2d = _run_noise_2d(x2d, amplitude, seed, lanes, grid, block_rows)
    return y2d.reshape(-1)[:total].reshape(orig_shape)


class NodeFeatureNoise:
    """Thin stateless wrapper mirroring the PyTorch module's interface."""

    def __init__(self, amplitude=0.1, clone=False, **kwargs):
        self.amplitude = amplitude
        self.clone = clone  # no-op in JAX (arrays are immutable)

    def __call__(self, x, seed=0):
        return node_feature_noise(x, amplitude=self.amplitude, seed=seed)


if __name__ == "__main__":
    key = jax.random.PRNGKey(0)
    # Node-feature matrix [num_nodes, num_features], matching data.x.
    x = jax.random.normal(key, (64, 128), dtype=jnp.float32)
    y = jax.block_until_ready(node_feature_noise(x, amplitude=0.1, seed=0))
    assert y.shape == x.shape and y.dtype == x.dtype
    assert bool(jnp.all(jnp.isfinite(y)))
    d = y - x
    dstd = float(jnp.std(d))
    dmean = float(jnp.mean(d))
    assert 0.07 < dstd < 0.13, dstd          # sigma should be ~ amplitude (0.1)
    assert abs(dmean) < 0.02, dmean          # zero-mean noise
    assert float(jnp.max(jnp.abs(d))) < 1.0

    # Non-128-aligned feature dim (real GNN sizes) -> padded flat path.
    x2 = jax.random.normal(jax.random.PRNGKey(1), (50, 100), dtype=jnp.float32)
    y2 = jax.block_until_ready(node_feature_noise(x2, amplitude=0.1, seed=3))
    assert y2.shape == x2.shape and bool(jnp.all(jnp.isfinite(y2)))
    d2 = y2 - x2
    assert 0.07 < float(jnp.std(d2)) < 0.13
    assert float(jnp.max(jnp.abs(d2))) < 1.0

    # bf16 features, 128-aligned -> direct path with halved HBM traffic.
    x3 = jax.random.normal(jax.random.PRNGKey(2), (64, 256), dtype=jnp.bfloat16)
    y3 = jax.block_until_ready(node_feature_noise(x3, amplitude=0.1, seed=7))
    assert y3.shape == x3.shape and y3.dtype == x3.dtype
    d3 = y3.astype(jnp.float32) - x3.astype(jnp.float32)
    assert bool(jnp.all(jnp.isfinite(d3)))
    assert 0.07 < float(jnp.std(d3)) < 0.13
    assert float(jnp.max(jnp.abs(d3))) < 1.0

    print("KERNEL_OK")
</pallas_src>

<mosaic_0001>
module attributes {stable_mosaic.version = 11 : i64} {
  func.func @_noise_kernel(%arg0: i32, %arg1: memref<1xi32, #tpu.memory_space<smem>>, %arg2: memref<32x128xf32, #tpu.memory_space<vmem>>, %arg3: memref<32x128xf32, #tpu.memory_space<vmem>>) attributes {dimension_semantics = [#tpu.dimension_semantics<parallel>], iteration_bounds = array<i64: 2>, scalar_prefetch = 1 : i64, scratch_operands = 0 : i64, tpu.core_type = #tpu.core_type<tc>, window_params = [{transform_indices = @transform_0, window_bounds = array<i64: 32, 128>}, {transform_indices = @transform_1, window_bounds = array<i64: 32, 128>}]} {
    %0 = tpu.iota {dimensions = array<i32: 0>} : vector<16x128xi32>
    %1 = tpu.iota {dimensions = array<i32: 1>} : vector<16x128xi32>
    %c2048_i32 = arith.constant 2048 : i32
    %2 = arith.muli %arg0, %c2048_i32 : i32
    %c128_i32 = arith.constant 128 : i32
    %3 = vector.broadcast %c128_i32 : i32 to vector<16x128xi32>
    %4 = arith.muli %0, %3 : vector<16x128xi32>
    %5 = vector.broadcast %2 : i32 to vector<16x128xi32>
    %6 = arith.addi %5, %4 : vector<16x128xi32>
    %7 = arith.addi %6, %1 : vector<16x128xi32>
    %c0 = arith.constant 0 : index
    %8 = memref.load %arg1[%c0] : memref<1xi32, #tpu.memory_space<smem>>
    %c-2048144777_i32 = arith.constant -2048144777 : i32
    %9 = arith.muli %8, %c-2048144777_i32 : i32
    %c1759714724_i32 = arith.constant 1759714724 : i32
    %10 = arith.addi %9, %c1759714724_i32 : i32
    %c-1640531535_i32 = arith.constant -1640531535 : i32
    %11 = vector.broadcast %c-1640531535_i32 : i32 to vector<16x128xi32>
    %12 = arith.muli %7, %11 : vector<16x128xi32>
    %13 = vector.broadcast %10 : i32 to vector<16x128xi32>
    %14 = arith.xori %12, %13 : vector<16x128xi32>
    %c16_i32 = arith.constant 16 : i32
    %15 = vector.broadcast %c16_i32 : i32 to vector<16x128xi32>
    %16 = arith.shrui %14, %15 : vector<16x128xi32>
    %17 = arith.xori %14, %16 : vector<16x128xi32>
    %c2146121005_i32 = arith.constant 2146121005 : i32
    %18 = vector.broadcast %c2146121005_i32 : i32 to vector<16x128xi32>
    %19 = arith.muli %17, %18 : vector<16x128xi32>
    %c15_i32 = arith.constant 15 : i32
    %20 = vector.broadcast %c15_i32 : i32 to vector<16x128xi32>
    %21 = arith.shrui %19, %20 : vector<16x128xi32>
    %22 = arith.xori %19, %21 : vector<16x128xi32>
    %c-2073254261_i32 = arith.constant -2073254261 : i32
    %23 = vector.broadcast %c-2073254261_i32 : i32 to vector<16x128xi32>
    %24 = arith.muli %22, %23 : vector<16x128xi32>
    %c16_i32_0 = arith.constant 16 : i32
    %25 = vector.broadcast %c16_i32_0 : i32 to vector<16x128xi32>
    %26 = arith.shrui %24, %25 : vector<16x128xi32>
    %27 = arith.xori %24, %26 : vector<16x128xi32>
    %c17_i32 = arith.constant 17 : i32
    %28 = vector.broadcast %c17_i32 : i32 to vector<16x128xi32>
    %29 = arith.shrui %27, %28 : vector<16x128xi32>
    %30 = arith.xori %27, %29 : vector<16x128xi32>
    %c-1028477379_i32 = arith.constant -1028477379 : i32
    %31 = vector.broadcast %c-1028477379_i32 : i32 to vector<16x128xi32>
    %32 = arith.muli %30, %31 : vector<16x128xi32>
    %c9_i32 = arith.constant 9 : i32
    %33 = vector.broadcast %c9_i32 : i32 to vector<16x128xi32>
    %34 = arith.shrui %27, %33 : vector<16x128xi32>
    %c1065353216_i32 = arith.constant 1065353216 : i32
    %35 = vector.broadcast %c1065353216_i32 : i32 to vector<16x128xi32>
    %36 = arith.ori %34, %35 : vector<16x128xi32>
    %37 = tpu.bitcast %36 : vector<16x128xi32> -> vector<16x128xf32>
    %cst = arith.constant 2.000000e+00 : f32
    %38 = vector.broadcast %cst : f32 to vector<16x128xf32>
    %39 = arith.subf %38, %37 : vector<16x128xf32>
    %c9_i32_1 = arith.constant 9 : i32
    %40 = vector.broadcast %c9_i32_1 : i32 to vector<16x128xi32>
    %41 = arith.shrui %32, %40 : vector<16x128xi32>
    %c1065353216_i32_2 = arith.constant 1065353216 : i32
    %42 = vector.broadcast %c1065353216_i32_2 : i32 to vector<16x128xi32>
    %43 = arith.ori %41, %42 : vector<16x128xi32>
    %44 = tpu.bitcast %43 : vector<16x128xi32> -> vector<16x128xf32>
    %cst_3 = arith.constant 1.000000e+00 : f32
    %45 = vector.broadcast %cst_3 : f32 to vector<16x128xf32>
    %46 = arith.subf %44, %45 : vector<16x128xf32>
    %47 = math.log %39 : vector<16x128xf32>
    %cst_4 = arith.constant -2.000000e+00 : f32
    %48 = vector.broadcast %cst_4 : f32 to vector<16x128xf32>
    %49 = arith.mulf %48, %47 : vector<16x128xf32>
    %50 = math.sqrt %49 : vector<16x128xf32>
    %cst_5 = arith.constant 1.000000e-01 : f32
    %51 = vector.broadcast %cst_5 : f32 to vector<16x128xf32>
    %52 = arith.mulf %51, %50 : vector<16x128xf32>
    %cst_6 = arith.constant 6.28318548 : f32
    %53 = vector.broadcast %cst_6 : f32 to vector<16x128xf32>
    %54 = arith.mulf %53, %46 : vector<16x128xf32>
    %55 = math.cos %54 : vector<16x128xf32>
    %56 = arith.mulf %52, %55 : vector<16x128xf32>
    %57 = math.sin %54 : vector<16x128xf32>
    %58 = arith.mulf %52, %57 : vector<16x128xf32>
    %c0_7 = arith.constant 0 : index
    %c0_8 = arith.constant 0 : index
    %59 = vector.load %arg2[%c0_7, %c0_8] : memref<32x128xf32, #tpu.memory_space<vmem>>, vector<16x128xf32>
    %60 = arith.addf %59, %56 : vector<16x128xf32>
    %c0_9 = arith.constant 0 : index
    %c0_10 = arith.constant 0 : index
    %61 = vector.load %arg3[%c0_9, %c0_10] : memref<32x128xf32, #tpu.memory_space<vmem>>, vector<16x128xf32>
    tpu.vector_store %arg3[%c0_9, %c0_10], %60 {strides = array<i32>} : memref<32x128xf32, #tpu.memory_space<vmem>>, vector<16x128xf32>,
    %c16 = arith.constant 16 : index
    %c0_11 = arith.constant 0 : index
    %62 = vector.load %arg2[%c16, %c0_11] : memref<32x128xf32, #tpu.memory_space<vmem>>, vector<16x128xf32>
    %63 = arith.addf %62, %58 : vector<16x128xf32>
    %c16_12 = arith.constant 16 : index
    %c0_13 = arith.constant 0 : index
    %64 = vector.load %arg3[%c16_12, %c0_13] : memref<32x128xf32, #tpu.memory_space<vmem>>, vector<16x128xf32>
    tpu.vector_store %arg3[%c16_12, %c0_13], %63 {strides = array<i32>} : memref<32x128xf32, #tpu.memory_space<vmem>>, vector<16x128xf32>,
    return
  }
  func.func @transform_0(%arg0: i32, %arg1: memref<1xi32, #tpu.memory_space<smem>>) -> (i32, i32) {
    %c0_i32 = arith.constant 0 : i32
    %c0_i32_0 = arith.constant 0 : i32
    return %arg0, %c0_i32 : i32, i32
  }
  func.func @transform_1(%arg0: i32, %arg1: memref<1xi32, #tpu.memory_space<smem>>) -> (i32, i32) {
    %c0_i32 = arith.constant 0 : i32
    %c0_i32_0 = arith.constant 0 : i32
    return %arg0, %c0_i32 : i32, i32
  }
}

</mosaic_0001>

<llo_original>
// kernel: tpu_custom_call.1
$region0: #{tpu_custom_call.1}
  #allocation0 [shape = 'u32[]', space=smem, size = 0x4, offset = 0x4, fixed_abs, tag = 'smem constant byte address 0x4 - core index']
  #allocation1 [shape = 'u32[72,128]{1,0:T(1,128)}', space=vmem, size = 0x9000, scoped, tag = 'internal scratch']
  #allocation2 [shape = 's32[1]{0}', space=sflag, size = 0x4, scoped, tag = 'scoped memory for tpu_custom_call.1']
  #allocation3 [shape = 's32[1]{0:T(128)S(6)}', space=smem, size = 0x200, scoped, tag = 'prefetched SMEM operand 0']
  %s0 = inlined_call_operand.<no memory space> [shape: s32[1], index: 0, kind: input, shape index: {}]
  %s1 = inlined_call_operand.hbm [shape: f32[64,128], index: 1, kind: input, shape index: {}]
  %s2 = inlined_call_operand.hbm [shape: f32[64,128], index: 2, kind: output, shape index: {}]
  %s3 = sld [smem:[#allocation0]]
  $region41: #{tpu_custom_call.1} parent=0
    _
  %s5 = ssub.s32 1, %s3
  %s6 = scalar_select 0, %s5, %s3
  %7 = sst [smem:[#allocation3]] %s0
  $region1: #{tpu_custom_call.1} parent=0
    #allocation4 [shape = 'u8[32768]{0}', space=vmem, size = 0x8000, scoped, tag = 'input window, operand 1']
    #allocation5 [shape = 's32[2]{0}', space=sflag, size = 0x8, scoped, tag = 'scoped memory for tpu_custom_call.1']
    #allocation6 [shape = 's32[2]{0}', space=sflag, size = 0x8, scoped, tag = 'scoped memory for tpu_custom_call.1']
    #allocation7 [shape = 'u8[32768]{0}', space=vmem, size = 0x8000, scoped, tag = 'output window, operand 0']
    %8 = vsyncpa [#allocation5], 0
    %s9 = scalar_lea.sflag [#allocation5], 1
    %10 = vsyncpa %s9, 0
    %11 = vsyncpa [#allocation6], 0
    %s12 = scalar_lea.sflag [#allocation6], 1
    %13 = vsyncpa %s12, 0
    loop: start=0, step=1, limit=4
    $region2: #{tpu_custom_call.1} parent=1 // loop_pre_header
      _
    $region3: #{tpu_custom_call.1} parent=1 // loop_header
      %s15 = sphi 0, %s19
      %p16 = scmp.ge.s32.totalorder %s15, 4
      %s25 = sphi 0, %s27
      %s28 = sphi 0, %s25
      %s29 = sphi 0, %s28
      %s45 = sphi 0, %s29
      %s51 = sphi 0, %s53
      %s54 = sphi 0, %s51
      %s55 = sphi 0, %s54
      %s71 = sphi 0, %s55
    $region4: #{tpu_custom_call.1} parent=1 // loop_header_branch
      %18 = sbr.rel (%p16) target = $region8
    $region5: #{tpu_custom_call.1} parent=1 // loop_body
      %s20 = ssub.s32 %s15, 1
      %s21 = ssub.s32 %s15, 2
      %s22 = sadd.s32 %s15, 1
      %s23 = ssub.s32 %s15, %s22
      %p24 = scmp.eq.s32.totalorder %s23, 0
      %s26 = sadd.s32 %s25, 1
      %s27 = scalar_select %p24, %s25, %s26
      %p30 = pneg %p24
      %p31 = scmp.eq.s32.totalorder %s15, 1
      %p32 = por %p30, %p31
      %p33 = scmp.ne.s32.totalorder %s25, %s28
      %p34 = scmp.eq.s32.totalorder %s15, 0
      %p35 = por %p33, %p34
      %p36 = scmp.ne.s32.totalorder %s25, %s28
      %p37 = scmp.eq.s32.totalorder %s20, 1
      %p38 = por %p36, %p37
      %p39 = scmp.ne.s32.totalorder %s28, %s29
      %p40 = scmp.eq.s32.totalorder %s20, 0
      %p41 = por %p39, %p40
      %p42 = scmp.ne.s32.totalorder %s28, %s29
      %p43 = scmp.eq.s32.totalorder %s21, 1
      %p44 = por %p42, %p43
      %p46 = scmp.ne.s32.totalorder %s29, %s45
      %p47 = scmp.eq.s32.totalorder %s21, 0
      %p48 = por %p46, %p47
      %s49 = ssub.s32 %s15, %s22
      %p50 = scmp.eq.s32.totalorder %s49, 0
      %s52 = sadd.s32 %s51, 1
      %s53 = scalar_select %p50, %s51, %s52
      %p56 = pneg %p50
      %p57 = scmp.eq.s32.totalorder %s15, 1
      %p58 = por %p56, %p57
      %p59 = scmp.ne.s32.totalorder %s51, %s54
      %p60 = scmp.eq.s32.totalorder %s15, 0
      %p61 = por %p59, %p60
      %p62 = scmp.ne.s32.totalorder %s51, %s54
      %p63 = scmp.eq.s32.totalorder %s20, 1
      %p64 = por %p62, %p63
      %p65 = scmp.ne.s32.totalorder %s54, %s55
      %p66 = scmp.eq.s32.totalorder %s20, 0
      %p67 = por %p65, %p66
      %p68 = scmp.ne.s32.totalorder %s54, %s55
      %p69 = scmp.eq.s32.totalorder %s21, 1
      %p70 = por %p68, %p69
      %p72 = scmp.ne.s32.totalorder %s55, %s71
      %p73 = scmp.eq.s32.totalorder %s21, 0
      %p74 = por %p72, %p73
      %p75 = scmp.le.s32.totalorder 1, %s15
      %p76 = scmp.lt.s32.totalorder %s15, 3
      %p77 = pnand %p75, %p76
      %p78 = pneg %p77
      // Predicated region
      $region9: #{tpu_custom_call.1} parent=5 // pred_check
        _
      $region10: #{tpu_custom_call.1} parent=5 // pred_check_branch
        %80 = sbr.rel (%p77) target = $region12
      $region11: #{tpu_custom_call.1} parent=5 // pred_region
        %s81 = ssub.s32 %s15, 1
      $region12: #{tpu_custom_call.1} parent=5 // pred_fallthru
        _
      %p82 = scmp.lt.s32.totalorder %s15, 2
      // Predicated region
      $region13: #{tpu_custom_call.1} parent=5 // pred_check
        %p83 = pneg %p82
      $region14: #{tpu_custom_call.1} parent=5 // pred_check_branch
        %85 = sbr.rel (%p83) target = $region16
      $region15: #{tpu_custom_call.1} parent=5 // pred_region
        // Predicated region
        $region17: #{tpu_custom_call.1} parent=15 // pred_check
          %p86 = pneg %p35
        $region18: #{tpu_custom_call.1} parent=15 // pred_check_branch
          %88 = sbr.rel (%p86) target = $region20
        $region19: #{tpu_custom_call.1} parent=15 // pred_region
          %s89 = sand.u32 %s25, 1
          %s90 = scalar_lea.sflag [#allocation5], %s89
          %s91 = sand.u32 %s25, 1
          %s92 = smul.addr %s91, 32
          %s93 = scalar_lea.vmem [#allocation4], %s92
          %s94 = smul.u32 4, %s15
          %96 = vsyncadd %s90, 0
          %s97 = smul.addr %s94, 8
          %s98 = scalar_lea.hbm %s1, %s97
          %s99 = sshll.u32 %s98, 4
          %s100 = int_to_ptr.hbm [resolvable:$true] %s99
          %s101 = sshll.u32 %s93, 4
          %s102 = int_to_ptr.vmem [resolvable:$true] %s101
          %107 = dma.hbm_to_vmem [thread:$0]  %s100, 512, %s102, %s90, 128, 128, 8
        $region20: #{tpu_custom_call.1} parent=15 // pred_fallthru
          _
      $region16: #{tpu_custom_call.1} parent=5 // pred_fallthru
        _
      %p108 = scmp.le.s32.totalorder 1, %s15
      %p109 = scmp.lt.s32.totalorder %s15, 3
      %p110 = pnand %p108, %p109
      %p111 = pneg %p110
      // Predicated region
      $region21: #{tpu_custom_call.1} parent=5 // pred_check
        _
      $region22: #{tpu_custom_call.1} parent=5 // pred_check_branch
        %113 = sbr.rel (%p110) target = $region24
      $region23: #{tpu_custom_call.1} parent=5 // pred_region
        %s114 = ssub.s32 %s15, 1
        %s115 = sand.u32 %s28, 1
        %s116 = scalar_lea.sflag [#allocation5], %s115
        %s117 = sand.u32 %s28, 1
        %s118 = smul.addr %s117, 32
        %s119 = scalar_lea.vmem [#allocation4], %s118
        // Predicated region
        $region25: #{tpu_custom_call.1} parent=23 // pred_check
          %p120 = pneg %p41
        $region26: #{tpu_custom_call.1} parent=23 // pred_check_branch
          %122 = sbr.rel (%p120) target = $region28
        $region27: #{tpu_custom_call.1} parent=23 // pred_region
          %124 = dma.done %s116, 512
        $region28: #{tpu_custom_call.1} parent=23 // pred_fallthru
          _
        %s125 = sand.u32 %s28, 1
        %s126 = scalar_lea.sflag [#allocation5], %s125
        %s127 = sand.u32 %s28, 1
        %s128 = smul.addr %s127, 32
        %s129 = scalar_lea.vmem [#allocation4], %s128
        %p130 = pneg %p41
        %p131 = pneg %p38
        %p132 = pneg %p67
        %p133 = pneg %p64
        %s134 = sand.u32 %s54, 1
        %s135 = scalar_lea.sflag [#allocation6], %s134
        %s136 = sand.u32 %s54, 1
        %s137 = smul.addr %s136, 32
        %s138 = scalar_lea.vmem [#allocation7], %s137
        %s139 = smul.u32 4, %s20
        %s140 = smul.u32 4, %s20
        %v141 = vlaneseq
        %v142 = vshrl.u32 %v141, 7
        %v143 = vadd.s32 %v142, 8
        %v144 = vlaneseq
        %v145 = vand.u32 %v144, 127
        %s146 = smul.u32 %s20, 2048
        %v147 = vmul.u32 %v142, 128
        %v148 = vmul.u32 %v143, 128
        %v149 = vstv %s146
        %v150 = vadd.s32 %v149, %v147
        %v151 = vadd.s32 %v149, %v148
        %v152 = vadd.s32 %v150, %v145
        %v153 = vadd.s32 %v151, %v145
        %s154 = sld [smem:[#allocation3]]
        %s155 = smul.u32 %s154, 2246822519
        %s156 = sadd.s32 %s155, 1759714724
        %v157 = vmul.u32 %v152, 2654435761
        %v158 = vmul.u32 %v153, 2654435761
        %v159 = vstv %s156
        %v160 = vxor.u32 %v157, %v159
        %v161 = vxor.u32 %v158, %v159
        %v162 = vshrl.u32 %v160, 16
        %v163 = vshrl.u32 %v161, 16
        %v164 = vxor.u32 %v160, %v162
        %v165 = vxor.u32 %v161, %v163
        %v166 = vmul.u32 %v164, 2146121005
        %v167 = vmul.u32 %v165, 2146121005
        %v168 = vshrl.u32 %v166, 15
        %v169 = vshrl.u32 %v167, 15
        %v170 = vxor.u32 %v166, %v168
        %v171 = vxor.u32 %v167, %v169
        %v172 = vmul.u32 %v170, 2221713035
        %v173 = vmul.u32 %v171, 2221713035
        %v174 = vshrl.u32 %v172, 16
        %v175 = vshrl.u32 %v173, 16
        %v176 = vxor.u32 %v172, %v174
        %v177 = vxor.u32 %v173, %v175
        %v178 = vshrl.u32 %v176, 17
        %v179 = vshrl.u32 %v177, 17
        %v180 = vxor.u32 %v176, %v178
        %v181 = vxor.u32 %v177, %v179
        %v182 = vmul.u32 %v180, 3266489917
        %v183 = vmul.u32 %v181, 3266489917
        %v184 = vshrl.u32 %v176, 9
        %v185 = vshrl.u32 %v177, 9
        %v186 = vor.u32 %v184, 1065353216
        %v187 = vor.u32 %v185, 1065353216
        %v190 = vsub.f32 2.0, %v186
        %v191 = vsub.f32 2.0, %v187
        %v192 = vshrl.u32 %v182, 9
        %v193 = vshrl.u32 %v183, 9
        %v194 = vor.u32 %v192, 1065353216
        %v195 = vor.u32 %v193, 1065353216
        %v198 = vsub.f32 %v194, 1.0
        %v199 = vsub.f32 %v195, 1.0
        %v200 = vlog2.pop %v190
        %v201 = vmul.f32 %v200, 0.6931472
        %v202 = vlog2.pop %v191
        %v203 = vmul.f32 %v202, 0.6931472
        %v204 = vmul.f32 %v201, -2.0
        %v205 = vmul.f32 %v203, -2.0
        %v206 = vrsqrt.pop %v204
        %v207 = vmul.f32 %v206, %v204
        %v208 = vmul.f32 %v207, %v206
        %v209 = vmul.f32 0.5, %v208
        %v210 = vsub.f32 1.5, %v209
        %v211 = vmul.f32 %v206, %v210
        %v212 = vmul.f32 %v204, %v211
        %vm213 = vcmp.eq.f32.partialorder %v204, inf
        %v214 = vsel %vm213, %v204, %v212
        %vm215 = vcmp.eq.f32.partialorder %v204, 0.0
        %v216 = vand.u32 %v204, 2147483648
        %v217 = vsel %vm215, %v216, %v214
        %v218 = vrsqrt.pop %v205
        %v219 = vmul.f32 %v218, %v205
        %v220 = vmul.f32 %v219, %v218
        %v221 = vmul.f32 0.5, %v220
        %v222 = vsub.f32 1.5, %v221
        %v223 = vmul.f32 %v218, %v222
        %v224 = vmul.f32 %v205, %v223
        %vm225 = vcmp.eq.f32.partialorder %v205, inf
        %v226 = vsel %vm225, %v205, %v224
        %vm227 = vcmp.eq.f32.partialorder %v205, 0.0
        %v228 = vand.u32 %v205, 2147483648
        %v229 = vsel %vm227, %v228, %v226
        %v230 = vmul.f32 %v217, 0.1
        %v231 = vmul.f32 %v229, 0.1
        %v232 = vmul.f32 %v198, 6.2831855
        %v233 = vmul.f32 %v199, 6.2831855
        %v234 = vand.u32 2147483647, %v232
        %vm235 = vcmp.le.f32.partialorder %v234, 0.7853982
        %vm236 = vcmp.lt.s32.totalorder %v232, 0
        %v237 = vand.u32 %v232, 2139095040
        %v238 = vshrl.u32 %v237, 23
        %v239 = vsub.s32 %v238, 127
        %v240 = vand.u32 2147483647, %v232
        %v241 = vand.u32 %v240, 8388607
        %v242 = vor.u32 %v241, 8388608
        %v243 = vsub.s32 0, %v242
        %v244 = vadd.s32 %v239, 1
        %vm245 = vcmp.gt.s32.totalorder %v244, 0
        %v246 = vsel %vm245, %v244, 0
        %v247 = vshrl.u32 %v246, 5
        %v248 = vand.u32 %v246, 31
        %v249 = vsub.s32 32, %v248
        %v250 = vshrl.u32 683565275, %v249
        %v251 = vshll.u32 683565275, %v248
        %v252 = vshrl.u32 2475754826, %v249
        %v253 = vor.u32 %v251, %v252
        %v254 = vshll.u32 2475754826, %v248
        %v255 = vshrl.u32 2131351028, %v249
        %v256 = vor.u32 %v254, %v255
        %v257 = vshll.u32 2131351028, %v248
        %v258 = vshrl.u32 2102212464, %v249
        %v259 = vor.u32 %v257, %v258
        %v260 = vshll.u32 2102212464, %v248
        %v261 = vshrl.u32 920167782, %v249
        %v262 = vor.u32 %v260, %v261
        %v263 = vshll.u32 920167782, %v248
        %v264 = vshrl.u32 1326507024, %v249
        %v265 = vor.u32 %v263, %v264
        %vm266 = vcmp.lt.s32.totalorder %v247, 1
        %vm267 = vcmp.lt.s32.totalorder %v247, 2
        %vm268 = vcmp.lt.s32.totalorder %v247, 3
        %vm269 = vcmp.lt.s32.totalorder %v247, 4
        %v270 = vsel %vm266, %v250, %v253
        %v271 = vsel %vm269, %v259, 2102212464
        %v272 = vsel %vm268, %v256, %v271
        %v273 = vsel %vm267, %v270, %v272
        %v274 = vsel %vm266, %v253, %v256
        %v275 = vsel %vm269, %v262, 920167782
        %v276 = vsel %vm268, %v259, %v275
        %v277 = vsel %vm267, %v274, %v276
        %v278 = vsel %vm266, %v256, %v259
        %v279 = vsel %vm269, %v265, 1326507024
        %v280 = vsel %vm268, %v262, %v279
        %v281 = vsel %vm267, %v278, %v280
        %v282 = vshll.u32 %v242, 8
        %v283 = vand.u32 %v282, 65535
        %v284 = vshrl.u32 %v282, 16
        %v285 = vand.u32 %v281, 65535
        %v286 = vshrl.u32 %v281, 16
        %v287 = vmul.u32 %v283, %v285
        %v288 = vmul.u32 %v283, %v286
        %v289 = vmul.u32 %v284, %v285
        %v290 = vmul.u32 %v284, %v286
        %v291 = vshll.u32 %v288, 16
        %v292 = vshrl.u32 %v288, 16
        %v293 = vshll.u32 %v289, 16
        %v294 = vshrl.u32 %v289, 16
        %vm295 = vc.u32 %v287, %v291
        %v296 = vsel %vm295, 1, 0
        %v297 = vadd.s32 %v287, %v291
        %v298 = vadd.s32 %v290, %v296
        %vm299 = vc.u32 %v297, %v293
        %v300 = vsel %vm299, 1, 0
        %v301 = vadd.s32 %v297, %v293
        %v302 = vadd.s32 %v298, %v300
        %v303 = vadd.s32 %v302, %v292
        %v304 = vadd.s32 %v303, %v294
        %v305 = vand.u32 %v282, 65535
        %v306 = vshrl.u32 %v282, 16
        %v307 = vand.u32 %v277, 65535
        %v308 = vshrl.u32 %v277, 16
        %v309 = vmul.u32 %v305, %v307
        %v310 = vmul.u32 %v305, %v308
        %v311 = vmul.u32 %v306, %v307
        %v312 = vmul.u32 %v306, %v308
        %v313 = vshll.u32 %v310, 16
        %v314 = vshrl.u32 %v310, 16
        %v315 = vshll.u32 %v311, 16
        %v316 = vshrl.u32 %v311, 16
        %vm317 = vc.u32 %v309, %v313
        %v318 = vsel %vm317, 1, 0
        %v319 = vadd.s32 %v309, %v313
        %v320 = vadd.s32 %v312, %v318
        %vm321 = vc.u32 %v319, %v315
        %v322 = vsel %vm321, 1, 0
        %v323 = vadd.s32 %v319, %v315
        %v324 = vadd.s32 %v320, %v322
        %v325 = vadd.s32 %v324, %v314
        %v326 = vadd.s32 %v325, %v316
        %v327 = vmul.u32 %v282, %v273
        %v328 = vadd.s32 %v304, %v323
        %vm329 = vc.u32 %v304, %v323
        %v330 = vadd.s32 %v326, 1
        %v331 = vsel %vm329, %v330, %v326
        %v332 = vadd.s32 %v327, %v331
        %v333 = vadd.s32 %v332, 536870912
        %v334 = vshrl.u32 %v333, 30
        %v335 = vshll.u32 %v334, 30
        %v336 = vsub.s32 %v332, %v335
        %vm337 = vcmp.lt.s32.totalorder %v336, 0
        %v338 = vsub.s32 0, %v336
        %v339 = vsel %vm337, %v338, %v336
        %v340 = vclz %v339
        %v341 = vsub.s32 %v340, 2
        %vm342 = vcmp.gt.s32.totalorder 0, %v341
        %v343 = vsel %vm342, 0, %v341
        %v344 = vsub.s32 32, %v343
        %v345 = vshll.u32 %v336, %v343
        %v346 = vshrl.u32 %v328, %v344
        %v347 = vor.u32 %v345, %v346
        %v348 = vsub.s32 4294967266, %v343
        %v349 = vadd.s32 %v348, 127
        %v350 = vshll.u32 %v349, 23
        %v351 = vor.u32 4788187, %v350
        %v352 = vand.u32 2147483647, %v351
        %v354 = vcvt.s32.f32 %v347
        %v355 = vmul.f32 %v354, %v352
        %v356 = vxor.u32 %v355, 2147483648
        %v357 = vsel %vm236, %v356, %v355
        %v358 = vsub.s32 4, %v334
        %v359 = vsel %vm236, %v358, %v334
        %v360 = vsel %vm235, %v232, %v357
        %v361 = vsel %vm235, 0, %v359
        %v362 = vmul.f32 %v360, %v360
        %v363 = vmul.f32 %v362, -0.001358992
        %v364 = vadd.f32 %v363, 0.041655596
        %v365 = vmul.f32 %v362, %v364
        %v366 = vadd.f32 %v365, -0.4999988
        %v367 = vmul.f32 %v362, %v366
        %v368 = vadd.f32 1.0, %v367
        %v369 = vmul.f32 %v360, %v360
        %v370 = vmul.f32 %v369, -0.00019511016
        %v371 = vadd.f32 %v370, 0.008332121
        %v372 = vmul.f32 %v369, %v371
        %v373 = vadd.f32 %v372, -0.16666654
        %v374 = vmul.f32 %v369, %v373
        %v375 = vadd.f32 %v374, 1.0
        %v376 = vmul.f32 %v375, %v360
        %vm377 = vweird.f32 %v232
        %v378 = vand.u32 %v361, 3
        %vm379 = vcmp.lt.s32.totalorder %v378, 2
        %vm380 = vcmp.eq.s32.totalorder %v378, 0
        %v381 = vxor.u32 %v376, 2147483648
        %v382 = vsel %vm380, %v368, %v381
        %vm383 = vcmp.eq.s32.totalorder %v378, 2
        %v384 = vxor.u32 %v368, 2147483648
        %v385 = vsel %vm383, %v384, %v376
        %v386 = vsel %vm379, %v382, %v385
        %v387 = vsel %vm377, nan, %v386
        %v388 = vand.u32 2147483647, %v233
        %vm389 = vcmp.le.f32.partialorder %v388, 0.7853982
        %vm390 = vcmp.lt.s32.totalorder %v233, 0
        %v391 = vand.u32 %v233, 2139095040
        %v392 = vshrl.u32 %v391, 23
        %v393 = vsub.s32 %v392, 127
        %v394 = vand.u32 2147483647, %v233
        %v395 = vand.u32 %v394, 8388607
        %v396 = vor.u32 %v395, 8388608
        %v397 = vsub.s32 0, %v396
        %v398 = vadd.s32 %v393, 1
        %vm399 = vcmp.gt.s32.totalorder %v398, 0
        %v400 = vsel %vm399, %v398, 0
        %v401 = vshrl.u32 %v400, 5
        %v402 = vand.u32 %v400, 31
        %v403 = vsub.s32 32, %v402
        %v404 = vshrl.u32 683565275, %v403
        %v405 = vshll.u32 683565275, %v402
        %v406 = vshrl.u32 2475754826, %v403
        %v407 = vor.u32 %v405, %v406
        %v408 = vshll.u32 2475754826, %v402
        %v409 = vshrl.u32 2131351028, %v403
        %v410 = vor.u32 %v408, %v409
        %v411 = vshll.u32 2131351028, %v402
        %v412 = vshrl.u32 2102212464, %v403
        %v413 = vor.u32 %v411, %v412
        %v414 = vshll.u32 2102212464, %v402
        %v415 = vshrl.u32 920167782, %v403
        %v416 = vor.u32 %v414, %v415
        %v417 = vshll.u32 920167782, %v402
        %v418 = vshrl.u32 1326507024, %v403
        %v419 = vor.u32 %v417, %v418
        %vm420 = vcmp.lt.s32.totalorder %v401, 1
        %vm421 = vcmp.lt.s32.totalorder %v401, 2
        %vm422 = vcmp.lt.s32.totalorder %v401, 3
        %vm423 = vcmp.lt.s32.totalorder %v401, 4
        %v424 = vsel %vm420, %v404, %v407
        %v425 = vsel %vm423, %v413, 2102212464
        %v426 = vsel %vm422, %v410, %v425
        %v427 = vsel %vm421, %v424, %v426
        %v428 = vsel %vm420, %v407, %v410
        %v429 = vsel %vm423, %v416, 920167782
        %v430 = vsel %vm422, %v413, %v429
        %v431 = vsel %vm421, %v428, %v430
        %v432 = vsel %vm420, %v410, %v413
        %v433 = vsel %vm423, %v419, 1326507024
        %v434 = vsel %vm422, %v416, %v433
        %v435 = vsel %vm421, %v432, %v434
        %v436 = vshll.u32 %v396, 8
        %v437 = vand.u32 %v436, 65535
        %v438 = vshrl.u32 %v436, 16
        %v439 = vand.u32 %v435, 65535
        %v440 = vshrl.u32 %v435, 16
        %v441 = vmul.u32 %v437, %v439
        %v442 = vmul.u32 %v437, %v440
        %v443 = vmul.u32 %v438, %v439
        %v444 = vmul.u32 %v438, %v440
        %v445 = vshll.u32 %v442, 16
        %v446 = vshrl.u32 %v442, 16
        %v447 = vshll.u32 %v443, 16
        %v448 = vshrl.u32 %v443, 16
        %vm449 = vc.u32 %v441, %v445
        %v450 = vsel %vm449, 1, 0
        %v451 = vadd.s32 %v441, %v445
        %v452 = vadd.s32 %v444, %v450
        %vm453 = vc.u32 %v451, %v447
        %v454 = vsel %vm453, 1, 0
        %v455 = vadd.s32 %v451, %v447
        %v456 = vadd.s32 %v452, %v454
        %v457 = vadd.s32 %v456, %v446
        %v458 = vadd.s32 %v457, %v448
        %v459 = vand.u32 %v436, 65535
        %v460 = vshrl.u32 %v436, 16
        %v461 = vand.u32 %v431, 65535
        %v462 = vshrl.u32 %v431, 16
        %v463 = vmul.u32 %v459, %v461
        %v464 = vmul.u32 %v459, %v462
        %v465 = vmul.u32 %v460, %v461
        %v466 = vmul.u32 %v460, %v462
        %v467 = vshll.u32 %v464, 16
        %v468 = vshrl.u32 %v464, 16
        %v469 = vshll.u32 %v465, 16
        %v470 = vshrl.u32 %v465, 16
        %vm471 = vc.u32 %v463, %v467
        %v472 = vsel %vm471, 1, 0
        %v473 = vadd.s32 %v463, %v467
        %v474 = vadd.s32 %v466, %v472
        %vm475 = vc.u32 %v473, %v469
        %v476 = vsel %vm475, 1, 0
        %v477 = vadd.s32 %v473, %v469
        %v478 = vadd.s32 %v474, %v476
        %v479 = vadd.s32 %v478, %v468
        %v480 = vadd.s32 %v479, %v470
        %v481 = vmul.u32 %v436, %v427
        %v482 = vadd.s32 %v458, %v477
        %vm483 = vc.u32 %v458, %v477
        %v484 = vadd.s32 %v480, 1
        %v485 = vsel %vm483, %v484, %v480
        %v486 = vadd.s32 %v481, %v485
        %v487 = vadd.s32 %v486, 536870912
        %v488 = vshrl.u32 %v487, 30
        %v489 = vshll.u32 %v488, 30
        %v490 = vsub.s32 %v486, %v489
        %vm491 = vcmp.lt.s32.totalorder %v490, 0
        %v492 = vsub.s32 0, %v490
        %v493 = vsel %vm491, %v492, %v490
        %v494 = vclz %v493
        %v495 = vsub.s32 %v494, 2
        %vm496 = vcmp.gt.s32.totalorder 0, %v495
        %v497 = vsel %vm496, 0, %v495
        %v498 = vsub.s32 32, %v497
        %v499 = vshll.u32 %v490, %v497
        %v500 = vshrl.u32 %v482, %v498
        %v501 = vor.u32 %v499, %v500
        %v502 = vsub.s32 4294967266, %v497
        %v503 = vadd.s32 %v502, 127
        %v504 = vshll.u32 %v503, 23
        %v505 = vor.u32 4788187, %v504
        %v506 = vand.u32 2147483647, %v505
        %v508 = vcvt.s32.f32 %v501
        %v509 = vmul.f32 %v508, %v506
        %v510 = vxor.u32 %v509, 2147483648
        %v511 = vsel %vm390, %v510, %v509
        %v512 = vsub.s32 4, %v488
        %v513 = vsel %vm390, %v512, %v488
        %v514 = vsel %vm389, %v233, %v511
        %v515 = vsel %vm389, 0, %v513
        %v516 = vmul.f32 %v514, %v514
        %v517 = vmul.f32 %v516, -0.001358992
        %v518 = vadd.f32 %v517, 0.041655596
        %v519 = vmul.f32 %v516, %v518
        %v520 = vadd.f32 %v519, -0.4999988
        %v521 = vmul.f32 %v516, %v520
        %v522 = vadd.f32 1.0, %v521
        %v523 = vmul.f32 %v514, %v514
        %v524 = vmul.f32 %v523, -0.00019511016
        %v525 = vadd.f32 %v524, 0.008332121
        %v526 = vmul.f32 %v523, %v525
        %v527 = vadd.f32 %v526, -0.16666654
        %v528 = vmul.f32 %v523, %v527
        %v529 = vadd.f32 %v528, 1.0
        %v530 = vmul.f32 %v529, %v514
        %vm531 = vweird.f32 %v233
        %v532 = vand.u32 %v515, 3
        %vm533 = vcmp.lt.s32.totalorder %v532, 2
        %vm534 = vcmp.eq.s32.totalorder %v532, 0
        %v535 = vxor.u32 %v530, 2147483648
        %v536 = vsel %vm534, %v522, %v535
        %vm537 = vcmp.eq.s32.totalorder %v532, 2
        %v538 = vxor.u32 %v522, 2147483648
        %v539 = vsel %vm537, %v538, %v530
        %v540 = vsel %vm533, %v536, %v539
        %v541 = vsel %vm531, nan, %v540
        %v542 = vmul.f32 %v230, %v387
        %v543 = vmul.f32 %v231, %v541
        %v544 = vand.u32 2147483647, %v232
        %vm545 = vcmp.le.f32.partialorder %v544, 0.7853982
        %vm546 = vcmp.lt.s32.totalorder %v232, 0
        %v547 = vand.u32 %v232, 2139095040
        %v548 = vshrl.u32 %v547, 23
        %v549 = vsub.s32 %v548, 127
        %v550 = vand.u32 2147483647, %v232
        %v551 = vand.u32 %v550, 8388607
        %v552 = vor.u32 %v551, 8388608
        %v553 = vsub.s32 0, %v552
        %v554 = vadd.s32 %v549, 1
        %vm555 = vcmp.gt.s32.totalorder %v554, 0
        %v556 = vsel %vm555, %v554, 0
        %v557 = vshrl.u32 %v556, 5
        %v558 = vand.u32 %v556, 31
        %v559 = vsub.s32 32, %v558
        %v560 = vshrl.u32 683565275, %v559
        %v561 = vshll.u32 683565275, %v558
        %v562 = vshrl.u32 2475754826, %v559
        %v563 = vor.u32 %v561, %v562
        %v564 = vshll.u32 2475754826, %v558
        %v565 = vshrl.u32 2131351028, %v559
        %v566 = vor.u32 %v564, %v565
        %v567 = vshll.u32 2131351028, %v558
        %v568 = vshrl.u32 2102212464, %v559
        %v569 = vor.u32 %v567, %v568
        %v570 = vshll.u32 2102212464, %v558
        %v571 = vshrl.u32 920167782, %v559
        %v572 = vor.u32 %v570, %v571
        %v573 = vshll.u32 920167782, %v558
        %v574 = vshrl.u32 1326507024, %v559
        %v575 = vor.u32 %v573, %v574
        %vm576 = vcmp.lt.s32.totalorder %v557, 1
        %vm577 = vcmp.lt.s32.totalorder %v557, 2
        %vm578 = vcmp.lt.s32.totalorder %v557, 3
        %vm579 = vcmp.lt.s32.totalorder %v557, 4
        %v580 = vsel %vm576, %v560, %v563
        %v581 = vsel %vm579, %v569, 2102212464
        %v582 = vsel %vm578, %v566, %v581
        %v583 = vsel %vm577, %v580, %v582
        %v584 = vsel %vm576, %v563, %v566
        %v585 = vsel %vm579, %v572, 920167782
        %v586 = vsel %vm578, %v569, %v585
        %v587 = vsel %vm577, %v584, %v586
        %v588 = vsel %vm576, %v566, %v569
        %v589 = vsel %vm579, %v575, 1326507024
        %v590 = vsel %vm578, %v572, %v589
        %v591 = vsel %vm577, %v588, %v590
        %v592 = vshll.u32 %v552, 8
        %v593 = vand.u32 %v592, 65535
        %v594 = vshrl.u32 %v592, 16
        %v595 = vand.u32 %v591, 65535
        %v596 = vshrl.u32 %v591, 16
        %v597 = vmul.u32 %v593, %v595
        %v598 = vmul.u32 %v593, %v596
        %v599 = vmul.u32 %v594, %v595
        %v600 = vmul.u32 %v594, %v596
        %v601 = vshll.u32 %v598, 16
        %v602 = vshrl.u32 %v598, 16
        %v603 = vshll.u32 %v599, 16
        %v604 = vshrl.u32 %v599, 16
        %vm605 = vc.u32 %v597, %v601
        %v606 = vsel %vm605, 1, 0
        %v607 = vadd.s32 %v597, %v601
        %v608 = vadd.s32 %v600, %v606
        %vm609 = vc.u32 %v607, %v603
        %v610 = vsel %vm609, 1, 0
        %v611 = vadd.s32 %v607, %v603
        %v612 = vadd.s32 %v608, %v610
        %v613 = vadd.s32 %v612, %v602
        %v614 = vadd.s32 %v613, %v604
        %v615 = vand.u32 %v592, 65535
        %v616 = vshrl.u32 %v592, 16
        %v617 = vand.u32 %v587, 65535
        %v618 = vshrl.u32 %v587, 16
        %v619 = vmul.u32 %v615, %v617
        %v620 = vmul.u32 %v615, %v618
        %v621 = vmul.u32 %v616, %v617
        %v622 = vmul.u32 %v616, %v618
        %v623 = vshll.u32 %v620, 16
        %v624 = vshrl.u32 %v620, 16
        %v625 = vshll.u32 %v621, 16
        %v626 = vshrl.u32 %v621, 16
        %vm627 = vc.u32 %v619, %v623
        %v628 = vsel %vm627, 1, 0
        %v629 = vadd.s32 %v619, %v623
        %v630 = vadd.s32 %v622, %v628
        %vm631 = vc.u32 %v629, %v625
        %v632 = vsel %vm631, 1, 0
        %v633 = vadd.s32 %v629, %v625
        %v634 = vadd.s32 %v630, %v632
        %v635 = vadd.s32 %v634, %v624
        %v636 = vadd.s32 %v635, %v626
        %v637 = vmul.u32 %v592, %v583
        %v638 = vadd.s32 %v614, %v633
        %vm639 = vc.u32 %v614, %v633
        %v640 = vadd.s32 %v636, 1
        %v641 = vsel %vm639, %v640, %v636
        %v642 = vadd.s32 %v637, %v641
        %v643 = vadd.s32 %v642, 536870912
        %v644 = vshrl.u32 %v643, 30
        %v645 = vshll.u32 %v644, 30
        %v646 = vsub.s32 %v642, %v645
        %vm647 = vcmp.lt.s32.totalorder %v646, 0
        %v648 = vsub.s32 0, %v646
        %v649 = vsel %vm647, %v648, %v646
        %v650 = vclz %v649
        %v651 = vsub.s32 %v650, 2
        %vm652 = vcmp.gt.s32.totalorder 0, %v651
        %v653 = vsel %vm652, 0, %v651
        %v654 = vsub.s32 32, %v653
        %v655 = vshll.u32 %v646, %v653
        %v656 = vshrl.u32 %v638, %v654
        %v657 = vor.u32 %v655, %v656
        %v658 = vsub.s32 4294967266, %v653
        %v659 = vadd.s32 %v658, 127
        %v660 = vshll.u32 %v659, 23
        %v661 = vor.u32 4788187, %v660
        %v662 = vand.u32 2147483647, %v661
        %v664 = vcvt.s32.f32 %v657
        %v665 = vmul.f32 %v664, %v662
        %v666 = vxor.u32 %v665, 2147483648
        %v667 = vsel %vm546, %v666, %v665
        %v668 = vsub.s32 4, %v644
        %v669 = vsel %vm546, %v668, %v644
        %v670 = vsel %vm545, %v232, %v667
        %v671 = vsel %vm545, 0, %v669
        %v672 = vmul.f32 %v670, %v670
        %v673 = vmul.f32 %v672, -0.001358992
        %v674 = vadd.f32 %v673, 0.041655596
        %v675 = vmul.f32 %v672, %v674
        %v676 = vadd.f32 %v675, -0.4999988
        %v677 = vmul.f32 %v672, %v676
        %v678 = vadd.f32 1.0, %v677
        %v679 = vmul.f32 %v670, %v670
        %v680 = vmul.f32 %v679, -0.00019511016
        %v681 = vadd.f32 %v680, 0.008332121
        %v682 = vmul.f32 %v679, %v681
        %v683 = vadd.f32 %v682, -0.16666654
        %v684 = vmul.f32 %v679, %v683
        %v685 = vadd.f32 %v684, 1.0
        %v686 = vmul.f32 %v685, %v670
        %vm687 = vweird.f32 %v232
        %v688 = vadd.s32 %v671, 3
        %v689 = vand.u32 %v688, 3
        %vm690 = vcmp.lt.s32.totalorder %v689, 2
        %vm691 = vcmp.eq.s32.totalorder %v689, 0
        %v692 = vxor.u32 %v686, 2147483648
        %v693 = vsel %vm691, %v678, %v692
        %vm694 = vcmp.eq.s32.totalorder %v689, 2
        %v695 = vxor.u32 %v678, 2147483648
        %v696 = vsel %vm694, %v695, %v686
        %v697 = vsel %vm690, %v693, %v696
        %v698 = vsel %vm687, nan, %v697
        %v699 = vand.u32 2147483647, %v233
        %vm700 = vcmp.le.f32.partialorder %v699, 0.7853982
        %vm701 = vcmp.lt.s32.totalorder %v233, 0
        %v702 = vand.u32 %v233, 2139095040
        %v703 = vshrl.u32 %v702, 23
        %v704 = vsub.s32 %v703, 127
        %v705 = vand.u32 2147483647, %v233
        %v706 = vand.u32 %v705, 8388607
        %v707 = vor.u32 %v706, 8388608
        %v708 = vsub.s32 0, %v707
        %v709 = vadd.s32 %v704, 1
        %vm710 = vcmp.gt.s32.totalorder %v709, 0
        %v711 = vsel %vm710, %v709, 0
        %v712 = vshrl.u32 %v711, 5
        %v713 = vand.u32 %v711, 31
        %v714 = vsub.s32 32, %v713
        %v715 = vshrl.u32 683565275, %v714
        %v716 = vshll.u32 683565275, %v713
        %v717 = vshrl.u32 2475754826, %v714
        %v718 = vor.u32 %v716, %v717
        %v719 = vshll.u32 2475754826, %v713
        %v720 = vshrl.u32 2131351028, %v714
        %v721 = vor.u32 %v719, %v720
        %v722 = vshll.u32 2131351028, %v713
        %v723 = vshrl.u32 2102212464, %v714
        %v724 = vor.u32 %v722, %v723
        %v725 = vshll.u32 2102212464, %v713
        %v726 = vshrl.u32 920167782, %v714
        %v727 = vor.u32 %v725, %v726
        %v728 = vshll.u32 920167782, %v713
        %v729 = vshrl.u32 1326507024, %v714
        %v730 = vor.u32 %v728, %v729
        %vm731 = vcmp.lt.s32.totalorder %v712, 1
        %vm732 = vcmp.lt.s32.totalorder %v712, 2
        %vm733 = vcmp.lt.s32.totalorder %v712, 3
        %vm734 = vcmp.lt.s32.totalorder %v712, 4
        %v735 = vsel %vm731, %v715, %v718
        %v736 = vsel %vm734, %v724, 2102212464
        %v737 = vsel %vm733, %v721, %v736
        %v738 = vsel %vm732, %v735, %v737
        %v739 = vsel %vm731, %v718, %v721
        %v740 = vsel %vm734, %v727, 920167782
        %v741 = vsel %vm733, %v724, %v740
        %v742 = vsel %vm732, %v739, %v741
        %v743 = vsel %vm731, %v721, %v724
        %v744 = vsel %vm734, %v730, 1326507024
        %v745 = vsel %vm733, %v727, %v744
        %v746 = vsel %vm732, %v743, %v745
        %v747 = vshll.u32 %v707, 8
        %v748 = vand.u32 %v747, 65535
        %v749 = vshrl.u32 %v747, 16
        %v750 = vand.u32 %v746, 65535
        %v751 = vshrl.u32 %v746, 16
        %v752 = vmul.u32 %v748, %v750
        %v753 = vmul.u32 %v748, %v751
        %v754 = vmul.u32 %v749, %v750
        %v755 = vmul.u32 %v749, %v751
        %v756 = vshll.u32 %v753, 16
        %v757 = vshrl.u32 %v753, 16
        %v758 = vshll.u32 %v754, 16
        %v759 = vshrl.u32 %v754, 16
        %vm760 = vc.u32 %v752, %v756
        %v761 = vsel %vm760, 1, 0
        %v762 = vadd.s32 %v752, %v756
        %v763 = vadd.s32 %v755, %v761
        %vm764 = vc.u32 %v762, %v758
        %v765 = vsel %vm764, 1, 0
        %v766 = vadd.s32 %v762, %v758
        %v767 = vadd.s32 %v763, %v765
        %v768 = vadd.s32 %v767, %v757
        %v769 = vadd.s32 %v768, %v759
        %v770 = vand.u32 %v747, 65535
        %v771 = vshrl.u32 %v747, 16
        %v772 = vand.u32 %v742, 65535
        %v773 = vshrl.u32 %v742, 16
        %v774 = vmul.u32 %v770, %v772
        %v775 = vmul.u32 %v770, %v773
        %v776 = vmul.u32 %v771, %v772
        %v777 = vmul.u32 %v771, %v773
        %v778 = vshll.u32 %v775, 16
        %v779 = vshrl.u32 %v775, 16
        %v780 = vshll.u32 %v776, 16
        %v781 = vshrl.u32 %v776, 16
        %vm782 = vc.u32 %v774, %v778
        %v783 = vsel %vm782, 1, 0
        %v784 = vadd.s32 %v774, %v778
        %v785 = vadd.s32 %v777, %v783
        %vm786 = vc.u32 %v784, %v780
        %v787 = vsel %vm786, 1, 0
        %v788 = vadd.s32 %v784, %v780
        %v789 = vadd.s32 %v785, %v787
        %v790 = vadd.s32 %v789, %v779
        %v791 = vadd.s32 %v790, %v781
        %v792 = vmul.u32 %v747, %v738
        %v793 = vadd.s32 %v769, %v788
        %vm794 = vc.u32 %v769, %v788
        %v795 = vadd.s32 %v791, 1
        %v796 = vsel %vm794, %v795, %v791
        %v797 = vadd.s32 %v792, %v796
        %v798 = vadd.s32 %v797, 536870912
        %v799 = vshrl.u32 %v798, 30
        %v800 = vshll.u32 %v799, 30
        %v801 = vsub.s32 %v797, %v800
        %vm802 = vcmp.lt.s32.totalorder %v801, 0
        %v803 = vsub.s32 0, %v801
        %v804 = vsel %vm802, %v803, %v801
        %v805 = vclz %v804
        %v806 = vsub.s32 %v805, 2
        %vm807 = vcmp.gt.s32.totalorder 0, %v806
        %v808 = vsel %vm807, 0, %v806
        %v809 = vsub.s32 32, %v808
        %v810 = vshll.u32 %v801, %v808
        %v811 = vshrl.u32 %v793, %v809
        %v812 = vor.u32 %v810, %v811
        %v813 = vsub.s32 4294967266, %v808
        %v814 = vadd.s32 %v813, 127
        %v815 = vshll.u32 %v814, 23
        %v816 = vor.u32 4788187, %v815
        %v817 = vand.u32 2147483647, %v816
        %v819 = vcvt.s32.f32 %v812
        %v820 = vmul.f32 %v819, %v817
        %v821 = vxor.u32 %v820, 2147483648
        %v822 = vsel %vm701, %v821, %v820
        %v823 = vsub.s32 4, %v799
        %v824 = vsel %vm701, %v823, %v799
        %v825 = vsel %vm700, %v233, %v822
        %v826 = vsel %vm700, 0, %v824
        %v827 = vmul.f32 %v825, %v825
        %v828 = vmul.f32 %v827, -0.001358992
        %v829 = vadd.f32 %v828, 0.041655596
        %v830 = vmul.f32 %v827, %v829
        %v831 = vadd.f32 %v830, -0.4999988
        %v832 = vmul.f32 %v827, %v831
        %v833 = vadd.f32 1.0, %v832
        %v834 = vmul.f32 %v825, %v825
        %v835 = vmul.f32 %v834, -0.00019511016
        %v836 = vadd.f32 %v835, 0.008332121
        %v837 = vmul.f32 %v834, %v836
        %v838 = vadd.f32 %v837, -0.16666654
        %v839 = vmul.f32 %v834, %v838
        %v840 = vadd.f32 %v839, 1.0
        %v841 = vmul.f32 %v840, %v825
        %vm842 = vweird.f32 %v233
        %v843 = vadd.s32 %v826, 3
        %v844 = vand.u32 %v843, 3
        %vm845 = vcmp.lt.s32.totalorder %v844, 2
        %vm846 = vcmp.eq.s32.totalorder %v844, 0
        %v847 = vxor.u32 %v841, 2147483648
        %v848 = vsel %vm846, %v833, %v847
        %vm849 = vcmp.eq.s32.totalorder %v844, 2
        %v850 = vxor.u32 %v833, 2147483648
        %v851 = vsel %vm849, %v850, %v841
        %v852 = vsel %vm845, %v848, %v851
        %v853 = vsel %vm842, nan, %v852
        %v854 = vmul.f32 %v230, %v698
        %v855 = vmul.f32 %v231, %v853
        %v856 = vld [vmem:[%s119] sm:$0xff]
        %v857 = vld [vmem:[%s119 + $0x8] sm:$0xff]
        %v858 = vadd.f32 %v856, %v542
        %v859 = vadd.f32 %v857, %v543
        %860 = vst [vmem:[%s138] sm:$0xff] %v858
        %861 = vst [vmem:[%s138 + $0x8] sm:$0xff] %v859
        %v862 = vld [vmem:[%s119 + $0x10] sm:$0xff]
        %v863 = vld [vmem:[%s119 + $0x18] sm:$0xff]
        %v864 = vadd.f32 %v862, %v854
        %v865 = vadd.f32 %v863, %v855
        %866 = vst [vmem:[%s138 + $0x10] sm:$0xff] %v864
        %867 = vst [vmem:[%s138 + $0x18] sm:$0xff] %v865
        %s868 = sand.u32 %s54, 1
        %s869 = scalar_lea.sflag [#allocation6], %s868
        %s870 = sand.u32 %s54, 1
        %s871 = smul.addr %s870, 32
        %s872 = scalar_lea.vmem [#allocation7], %s871
        // Predicated region
        $region29: #{tpu_custom_call.1} parent=23 // pred_check
          %p873 = pneg %p64
        $region30: #{tpu_custom_call.1} parent=23 // pred_check_branch
          %875 = sbr.rel (%p873) target = $region32
        $region31: #{tpu_custom_call.1} parent=23 // pred_region
          %s876 = smul.u32 4, %s20
          %878 = vsyncadd %s869, 0
          %s879 = smul.addr %s876, 8
          %s880 = scalar_lea.hbm %s2, %s879
          %s881 = sshll.u32 %s872, 4
          %s882 = int_to_ptr.vmem [resolvable:$true] %s881
          %s883 = sshll.u32 %s880, 4
          %s884 = int_to_ptr.hbm [resolvable:$true] %s883
          %889 = dma.vmem_to_hbm [thread:$0]  %s882, 512, %s884, %s869, 128, 128, 8
        $region32: #{tpu_custom_call.1} parent=23 // pred_fallthru
          _
      $region24: #{tpu_custom_call.1} parent=5 // pred_fallthru
        _
      %p890 = scmp.le.s32.totalorder 2, %s15
      // Predicated region
      $region33: #{tpu_custom_call.1} parent=5 // pred_check
        %p891 = pneg %p890
      $region34: #{tpu_custom_call.1} parent=5 // pred_check_branch
        %893 = sbr.rel (%p891) target = $region36
      $region35: #{tpu_custom_call.1} parent=5 // pred_region
        %s894 = ssub.s32 %s15, 2
        // Predicated region
        $region37: #{tpu_custom_call.1} parent=35 // pred_check
          %p895 = pneg %p70
        $region38: #{tpu_custom_call.1} parent=35 // pred_check_branch
          %897 = sbr.rel (%p895) target = $region40
        $region39: #{tpu_custom_call.1} parent=35 // pred_region
          %s898 = sand.u32 %s55, 1
          %s899 = scalar_lea.sflag [#allocation6], %s898
          %s900 = sand.u32 %s55, 1
          %s901 = smul.addr %s900, 32
          %s902 = scalar_lea.vmem [#allocation7], %s901
          %904 = dma.done %s899, 512
        $region40: #{tpu_custom_call.1} parent=35 // pred_fallthru
          _
      $region36: #{tpu_custom_call.1} parent=5 // pred_fallthru
        _
    $region6: #{tpu_custom_call.1} parent=1 // loop_footer
      %s19 = sadd.s32 1, %s15
    $region7: #{tpu_custom_call.1} parent=1 // loop_footer_branch
      %14 = sbr.rel target = $region3
    $region8: #{tpu_custom_call.1} parent=1 // loop_exit
      _
    %905 = vsyncpa [#allocation5], 1
    %s906 = scalar_lea.sflag [#allocation5], 1
    %907 = vsyncpa %s906, 1
    %908 = vsyncpa [#allocation6], 1
    %s909 = scalar_lea.sflag [#allocation6], 1
    %910 = vsyncpa %s909, 1

</llo_original>
